<compile_context>
chip_gen: v7x
topology: tpu7x:2x2x1
jax: 0.10.0
libtpu: 0.0.40
codegen_flags: <defaults>
</compile_context>

<pallas_src>
import functools

import jax
import jax.numpy as jnp
import numpy as np
from jax.experimental import pallas as pl
from jax.experimental.pallas import tpu as pltpu


# ---------------------------------------------------------------------------
# kernels
# ---------------------------------------------------------------------------

def _se_down_kernel_flat(p_ref, x_ref, in_ref, o_ref, sum_scr, *, n_in_ch):
    """Lane-dense layout for small spatial sizes.

    p_ref:   (S, S2)  f32    pooling map, 1/(4*c) folded in; resident.
    x_ref:   (TB, TC, S)     current (batch-block, channel-block) of x.
    in_ref:  (TB, CI*S2)     in_data block, channels folded onto the lane axis.
    o_ref:   (TB, CI*S2)     output block.
    sum_scr: (TB, S)  f32    running channel sum across the k grid axis.
    """
    k = pl.program_id(1)

    @pl.when(k == 0)
    def _init():
        sum_scr[...] = jnp.zeros_like(sum_scr)

    # Partial channel sum; dtype=f32 folds the up-cast into the accumulation
    # (no full-tile f32 materialisation for bf16 inputs).
    sum_scr[...] += jnp.sum(x_ref[...], axis=1, dtype=jnp.float32)

    @pl.when(k == pl.num_programs(1) - 1)
    def _finalize():
        # Channel mean + 2x2 average pool in one matmul; result is lane-flat.
        gate = jnp.dot(sum_scr[...], p_ref[...],
                       preferred_element_type=jnp.float32)        # (TB, S2)
        # Broadcast the gate over in_data's channels (folded into lanes).
        gate_full = jnp.concatenate([gate] * n_in_ch, axis=-1)     # (TB, CI*S2)
        # Multiply in f32 (bf16 inputs promote), cast once on store.
        o_ref[...] = (in_ref[...] * gate_full).astype(o_ref.dtype)


def _se_down_kernel_tiled(q_ref, x_ref, in_ref, o_ref, sum_scr, *, w, h2, w2):
    """Row-pair layout for large spatial sizes.

    q_ref:   (2*w, w2) f32     pooling map, 1/(4*c) folded in; resident.
    x_ref:   (TB, TC, h2, 2*w) current (batch-block, channel-block) of x.
    in_ref:  (TB, CI, h2*w2)   lane-dense in_data block.
    o_ref:   (TB, CI, h2*w2)   output block.
    sum_scr: (TB, h2, 2*w) f32 running channel sum across the k grid axis.
    """
    k = pl.program_id(1)

    @pl.when(k == 0)
    def _init():
        sum_scr[...] = jnp.zeros_like(sum_scr)

    sum_scr[...] += jnp.sum(x_ref[...], axis=1, dtype=jnp.float32)

    @pl.when(k == pl.num_programs(1) - 1)
    def _finalize():
        tb = sum_scr.shape[0]
        # Fold batch into the matmul M dim: one (TB*h2, 2w) x (2w, w2) matmul
        # (leading-dim merge is layout-free) instead of TB tiny batched dots.
        m = sum_scr[...].reshape(tb * h2, 2 * w)
        y = jnp.dot(m, q_ref[...], preferred_element_type=jnp.float32)
        y = y.reshape(tb, h2, w2)
        # Flatten (h2, w2) onto the lane axis without a scratch round-trip.
        if h2 <= 128:
            gate = jnp.concatenate([y[:, i, :] for i in range(h2)], axis=-1)
        else:
            gate = y.reshape(tb, h2 * w2)
        o_ref[...] = (in_ref[...] * gate[:, None, :]).astype(o_ref.dtype)


# ---------------------------------------------------------------------------
# wrapper
# ---------------------------------------------------------------------------

def _round_up(n, m):
    return -(-n // m) * m


def _hw_info():
    """Physical per-core VMEM and whether the device exposes 2 TensorCores."""
    vmem_cap = 64 << 20          # conservative default (v7x per-core VMEM)
    multi_tc = False
    try:
        get_info = getattr(pltpu, "get_tpu_info", None)
        if get_info is not None:
            vmem_cap = int(get_info().vmem_capacity_bytes)
    except Exception:
        pass
    try:
        kind = jax.devices()[0].device_kind.lower()
        multi_tc = any(t in kind for t in ("v4", "v5p", "v7", "7x"))
    except Exception:
        pass
    return vmem_cap, multi_tc


@functools.partial(jax.jit, static_argnames=("H", "W"))
def se_layer_down(in_data, x, *, H, W):
    """Pallas implementation of SELayer_down(H, W).forward(in_data, x)."""
    b, c, h, w = x.shape
    bi, ci, h2, w2 = in_data.shape
    assert bi == b
    # TODO(synk): general AdaptiveAvgPool2d with x spatial != (H, W) or odd
    # H/W (uneven adaptive bins) is not implemented; the module uses h==H, w==W.
    assert h == H and w == W, "kernel assumes x spatial size equals (H, W)"
    assert h % 2 == 0 and w % 2 == 0, "kernel assumes even H, W (exact 2x2 pool)"
    assert h2 == H // 2 and w2 == W // 2, "in_data spatial must be (H//2, W//2)"

    S, S2 = h * w, h2 * w2
    x_isz = x.dtype.itemsize
    io_isz = in_data.dtype.itemsize

    vmem_cap, multi_tc = _hw_info()
    # ~16 MiB of streamed bytes per grid step on 128 MiB-VMEM chips, ~8 MiB on
    # v7x: the kernel is mem-bound, so bigger steps amortise per-step overhead
    # and the once-per-batch-block finalize.
    target = min(16 << 20, max(vmem_cap // 8, 2 << 20))

    # Layout regime: lane-dense + full pooling matrix for small spatial sizes.
    flat = (S * S2 * 4) <= (4 << 20)

    # ---- channel block size (reduction axis).
    x_bpc = S * x_isz                            # x bytes per (batch, channel)
    if c * x_bpc <= 2 * target:
        tc = c
    else:
        tc = max(1, target // x_bpc)
        if flat:
            tc = max(8, (tc // 8) * 8)           # sublane dim of the (TB,TC,S) block
        tc = min(tc, c)

    # ---- batch block size (parallel axis).
    io_bpb = 2 * ci * S2 * io_isz                # in + out bytes per batch row
    per_b = tc * x_bpc + io_bpb
    tb = max(1, min(b, target // max(per_b, 1)))
    if multi_tc and b >= 2:
        tb = min(tb, (b + 1) // 2)               # >= 2 batch steps on 2-TC chips only
    if flat and tb < b:
        tb = max(8, (tb // 8) * 8)               # sublane dim of the (TB, CI*S2) block
        if tb > b:
            tb = b
    tb = min(tb, b)

    c_pad = _round_up(c, tc)
    b_pad = _round_up(b, tb)
    grid = (b_pad // tb, c_pad // tc)

    inv = 1.0 / (4.0 * c)                        # channel mean + 2x2 average folded in
    if flat:
        # Pooling map from flat source pixel l = r*w + cc to flat pooled pixel
        # j = (r//2)*w2 + (cc//2).  Built once; constant-folded under jit.
        src = jnp.arange(S, dtype=jnp.int32)
        cell = (src // w // 2) * w2 + (src % w) // 2
        col = jnp.arange(S2, dtype=jnp.int32)
        pool = jnp.where(cell[:, None] == col[None, :], inv, 0.0).astype(jnp.float32)

        x_op = x.reshape(b, c, S)                # fully lane-dense x
        in_op = in_data.reshape(b, ci * S2)      # channels folded onto lanes
    else:
        # x rows hold the two source image rows of one pooled row:
        # [row 2*i2 (w lanes) | row 2*i2+1 (w lanes)].
        li = jnp.arange(2 * w, dtype=jnp.int32)[:, None]
        ji = jnp.arange(w2, dtype=jnp.int32)[None, :]
        d = li - 2 * ji
        pool = jnp.where((d == 0) | (d == 1) | (d == w) | (d == w + 1),
                         inv, 0.0).astype(jnp.float32)

        x_op = x.reshape(b, c, h2, 2 * w)
        in_op = in_data.reshape(b, ci, S2)

    # Ragged shapes: zero-pad instead of shrinking block sizes (zero channels
    # do not change the channel sum; padded batch rows are sliced off).
    if c_pad != c:
        padc = [(0, 0)] * x_op.ndim
        padc[1] = (0, c_pad - c)
        x_op = jnp.pad(x_op, padc)
    if b_pad != b:
        padb = [(0, 0)] * x_op.ndim
        padb[0] = (0, b_pad - b)
        x_op = jnp.pad(x_op, padb)
        padi = [(0, 0)] * in_op.ndim
        padi[0] = (0, b_pad - b)
        in_op = jnp.pad(in_op, padi)

    if flat:
        kernel = functools.partial(_se_down_kernel_flat, n_in_ch=ci)
        in_specs = [
            pl.BlockSpec(pool.shape, lambda i, k: (0, 0)),              # resident
            pl.BlockSpec((tb, tc, S), lambda i, k: (i, k, 0)),
            pl.BlockSpec((tb, ci * S2), lambda i, k: (i, 0)),
        ]
        out_spec = pl.BlockSpec((tb, ci * S2), lambda i, k: (i, 0))
        out_shape = jax.ShapeDtypeStruct((b_pad, ci * S2), in_data.dtype)
        scratch = [pltpu.VMEM((tb, S), jnp.float32)]
        scr_bytes = max(tb, 8) * S * 4
    else:
        kernel = functools.partial(_se_down_kernel_tiled, w=w, h2=h2, w2=w2)
        in_specs = [
            pl.BlockSpec(pool.shape, lambda i, k: (0, 0)),              # resident
            pl.BlockSpec((tb, tc, h2, 2 * w), lambda i, k: (i, k, 0, 0)),
            pl.BlockSpec((tb, ci, S2), lambda i, k: (i, 0, 0)),
        ]
        out_spec = pl.BlockSpec((tb, ci, S2), lambda i, k: (i, 0, 0))
        out_shape = jax.ShapeDtypeStruct((b_pad, ci, S2), in_data.dtype)
        scratch = [pltpu.VMEM((tb, h2, 2 * w), jnp.float32)]
        scr_bytes = tb * max(h2, 8) * 2 * w * 4

    # Explicit VMEM budget: double-buffered streamed tiles + resident pooling
    # matrix + scratch, capped at 0.75x physical VMEM (stays legal on v7x).
    x_tile = tb * tc * S * x_isz
    io_tile = tb * ci * S2 * io_isz
    pool_bytes = pool.shape[0] * pool.shape[1] * 4
    needed = 2 * (x_tile + 2 * io_tile) + 2 * pool_bytes + scr_bytes + (4 << 20)
    vmem_limit = int(min(max(needed, 32 << 20), max(int(0.75 * vmem_cap), 32 << 20)))

    out_op = pl.pallas_call(
        kernel,
        out_shape=out_shape,
        grid_spec=pltpu.PrefetchScalarGridSpec(
            num_scalar_prefetch=0,
            grid=grid,
            in_specs=in_specs,
            out_specs=out_spec,
            scratch_shapes=scratch,
        ),
        compiler_params=pltpu.CompilerParams(
            dimension_semantics=("parallel", "arbitrary"),
            vmem_limit_bytes=vmem_limit,
        ),
    )(pool, x_op, in_op)

    if b_pad != b:
        out_op = out_op[:b]
    return out_op.reshape(b, ci, h2, w2)


# ---------------------------------------------------------------------------
# reference + test
# ---------------------------------------------------------------------------

def _reference(in_data, x):
    b, _, h, w = x.shape
    m = jnp.mean(x.astype(jnp.float32), axis=1, keepdims=True)        # (b,1,h,w)
    y = m.reshape(b, 1, h // 2, 2, w // 2, 2).mean(axis=(3, 5))        # (b,1,h/2,w/2)
    return (in_data.astype(jnp.float32) * y).astype(in_data.dtype)


if __name__ == "__main__":
    H, W = 16, 16
    b, c = 2, 4          # channels of x
    ci = 4               # channels of in_data

    key = jax.random.PRNGKey(0)
    k1, k2 = jax.random.split(key)
    x = jax.random.normal(k1, (b, c, H, W), dtype=jnp.float32)
    in_data = jax.random.normal(k2, (b, ci, H // 2, W // 2), dtype=jnp.float32)

    out = jax.block_until_ready(se_layer_down(in_data, x, H=H, W=W))
    ref = _reference(in_data, x)

    # Tolerance covers the case where the MXU runs the f32 pooling matmul at
    # reduced operand precision under default precision; genuine layout /
    # scaling bugs produce O(0.1-1) errors and would still be caught.
    np.testing.assert_allclose(np.asarray(out), np.asarray(ref),
                               rtol=1e-2, atol=1e-2)

    print("KERNEL_OK")
</pallas_src>

<mosaic_0001>
module attributes {stable_mosaic.version = 11 : i64} {
  func.func @_se_down_kernel_flat(%arg0: i32, %arg1: i32, %arg2: memref<256x64xf32, #tpu.memory_space<vmem>>, %arg3: memref<2x4x256xf32, #tpu.memory_space<vmem>>, %arg4: memref<2x256xf32, #tpu.memory_space<vmem>>, %arg5: memref<2x256xf32, #tpu.memory_space<vmem>>, %arg6: memref<2x256xf32, #tpu.memory_space<vmem>>) attributes {dimension_semantics = [#tpu.dimension_semantics<parallel>, #tpu.dimension_semantics<arbitrary>], iteration_bounds = array<i64: 1, 1>, scalar_prefetch = 0 : i64, scratch_operands = 1 : i64, tpu.core_type = #tpu.core_type<tc>, window_params = [{pipeline_mode = #tpu.pipeline_mode<synchronous>, transform_indices = @transform_0, window_bounds = array<i64: 256, 64>}, {transform_indices = @transform_1, window_bounds = array<i64: 2, 4, 256>}, {transform_indices = @transform_2, window_bounds = array<i64: 2, 256>}, {transform_indices = @transform_3, window_bounds = array<i64: 2, 256>}]} {
    %c0_i32 = arith.constant 0 : i32
    %0 = arith.cmpi eq, %arg1, %c0_i32 : i32
    %1 = arith.extui %0 : i1 to i32
    %c0_i32_0 = arith.constant 0 : i32
    %2 = arith.cmpi ne, %1, %c0_i32_0 : i32
    scf.if %2 {
      %cst_9 = arith.constant 0.000000e+00 : f32
      %11 = vector.broadcast %cst_9 : f32 to vector<2x256xf32>
      %c0_10 = arith.constant 0 : index
      %c0_11 = arith.constant 0 : index
      %12 = vector.load %arg6[%c0_10, %c0_11] : memref<2x256xf32, #tpu.memory_space<vmem>>, vector<2x256xf32>
      tpu.vector_store %arg6[%c0_10, %c0_11], %11 {strides = array<i32>} : memref<2x256xf32, #tpu.memory_space<vmem>>, vector<2x256xf32>,
    } else {
    }
    %c0 = arith.constant 0 : index
    %c0_1 = arith.constant 0 : index
    %3 = vector.load %arg6[%c0, %c0_1] : memref<2x256xf32, #tpu.memory_space<vmem>>, vector<2x256xf32>
    %c0_2 = arith.constant 0 : index
    %c0_3 = arith.constant 0 : index
    %c0_4 = arith.constant 0 : index
    %4 = vector.load %arg3[%c0_2, %c0_3, %c0_4] : memref<2x4x256xf32, #tpu.memory_space<vmem>>, vector<2x4x256xf32>
    %cst = arith.constant dense<0.000000e+00> : vector<2x256xf32>
    %5 = vector.multi_reduction <add>, %4, %cst [1] : vector<2x4x256xf32> to vector<2x256xf32>
    %6 = arith.addf %3, %5 : vector<2x256xf32>
    %c0_5 = arith.constant 0 : index
    %c0_6 = arith.constant 0 : index
    %7 = vector.load %arg6[%c0_5, %c0_6] : memref<2x256xf32, #tpu.memory_space<vmem>>, vector<2x256xf32>
    tpu.vector_store %arg6[%c0_5, %c0_6], %6 {strides = array<i32>} : memref<2x256xf32, #tpu.memory_space<vmem>>, vector<2x256xf32>,
    %c0_i32_7 = arith.constant 0 : i32
    %8 = arith.cmpi eq, %arg1, %c0_i32_7 : i32
    %9 = arith.extui %8 : i1 to i32
    %c0_i32_8 = arith.constant 0 : i32
    %10 = arith.cmpi ne, %9, %c0_i32_8 : i32
    scf.if %10 {
      %c0_9 = arith.constant 0 : index
      %c0_10 = arith.constant 0 : index
      %11 = vector.load %arg6[%c0_9, %c0_10] : memref<2x256xf32, #tpu.memory_space<vmem>>, vector<2x256xf32>
      %c0_11 = arith.constant 0 : index
      %c0_12 = arith.constant 0 : index
      %12 = vector.load %arg2[%c0_11, %c0_12] : memref<256x64xf32, #tpu.memory_space<vmem>>, vector<256x64xf32>
      %cst_13 = arith.constant dense<0.000000e+00> : vector<2x64xf32>
      %13 = tpu.matmul %11, %12, %cst_13 {dimension_numbers = #tpu.dot_dimension_numbers<[1], [0], [0], [1], [0, 0, 1, 1], [], []>} : vector<2x256xf32>, vector<256x64xf32>, vector<2x64xf32> -> vector<2x64xf32>
      %14 = tpu.concatenate %13, %13, %13, %13 in 1 : vector<2x64xf32>, vector<2x64xf32>, vector<2x64xf32>, vector<2x64xf32> -> vector<2x256xf32>
      %c0_14 = arith.constant 0 : index
      %c0_15 = arith.constant 0 : index
      %15 = vector.load %arg4[%c0_14, %c0_15] : memref<2x256xf32, #tpu.memory_space<vmem>>, vector<2x256xf32>
      %16 = arith.mulf %15, %14 : vector<2x256xf32>
      %c0_16 = arith.constant 0 : index
      %c0_17 = arith.constant 0 : index
      %17 = vector.load %arg5[%c0_16, %c0_17] : memref<2x256xf32, #tpu.memory_space<vmem>>, vector<2x256xf32>
      tpu.vector_store %arg5[%c0_16, %c0_17], %16 {strides = array<i32>} : memref<2x256xf32, #tpu.memory_space<vmem>>, vector<2x256xf32>,
    } else {
    }
    return
  }
  func.func @transform_0(%arg0: i32, %arg1: i32) -> (i32, i32) {
    %c0_i32 = arith.constant 0 : i32
    %c0_i32_0 = arith.constant 0 : i32
    %c0_i32_1 = arith.constant 0 : i32
    return %c0_i32, %c0_i32_0 : i32, i32
  }
  func.func @transform_1(%arg0: i32, %arg1: i32) -> (i32, i32, i32) {
    %c0_i32 = arith.constant 0 : i32
    %c0_i32_0 = arith.constant 0 : i32
    return %arg0, %arg1, %c0_i32 : i32, i32, i32
  }
  func.func @transform_2(%arg0: i32, %arg1: i32) -> (i32, i32) {
    %c0_i32 = arith.constant 0 : i32
    %c0_i32_0 = arith.constant 0 : i32
    return %arg0, %c0_i32 : i32, i32
  }
  func.func @transform_3(%arg0: i32, %arg1: i32) -> (i32, i32) {
    %c0_i32 = arith.constant 0 : i32
    %c0_i32_0 = arith.constant 0 : i32
    return %arg0, %c0_i32 : i32, i32
  }
}

</mosaic_0001>

<llo_original>
// kernel: se_layer_down.1
$region0: #{se_layer_down.1}
  #allocation0 [shape = 'u32[]', space=smem, size = 0x4, offset = 0x4, fixed_abs, tag = 'smem constant byte address 0x4 - core index']
  #allocation1 [shape = 'u32[144,128]{1,0:T(1,128)}', space=vmem, size = 0x12000, scoped, tag = 'internal scratch']
  #allocation2 [shape = 'f32[2,256]{1,0:T(2,128)}', space=vmem, size = 0x800, scoped, tag = 'scratch operand']
  %s0 = inlined_call_operand.vmem [shape: f32[256,64], index: 0, kind: input, shape index: {}]
  %s1 = inlined_call_operand.vmem [shape: f32[2,4,256], index: 1, kind: input, shape index: {}]
  %s2 = inlined_call_operand.vmem [shape: f32[2,256], index: 2, kind: input, shape index: {}]
  %s3 = inlined_call_operand.vmem [shape: f32[2,256], index: 3, kind: output, shape index: {}]
  %s4 = sld [smem:[#allocation0]]
  $region30: #{se_layer_down.1} parent=0
    _
  %s6 = ssub.s32 1, %s4
  %s7 = scalar_select 0, %s6, %s4
  // Predicated region
  $region2: #{se_layer_down.1} parent=0 // pred_check
    _
  $region3: #{se_layer_down.1} parent=0 // pred_check_branch
    %9 = sbr.rel (0) target = $region5
  $region4: #{se_layer_down.1} parent=0 // pred_region
    _
  $region5: #{se_layer_down.1} parent=0 // pred_fallthru
    _
  // Predicated region
  $region6: #{se_layer_down.1} parent=0 // pred_check
    _
  $region7: #{se_layer_down.1} parent=0 // pred_check_branch
    %11 = sbr.rel (0) target = $region9
  $region8: #{se_layer_down.1} parent=0 // pred_region
    _
  $region9: #{se_layer_down.1} parent=0 // pred_fallthru
    _
  // Predicated region
  $region10: #{se_layer_down.1} parent=0 // pred_check
    _
  $region11: #{se_layer_down.1} parent=0 // pred_check_branch
    %13 = sbr.rel (0) target = $region13
  $region12: #{se_layer_down.1} parent=0 // pred_region
    _
  $region13: #{se_layer_down.1} parent=0 // pred_fallthru
    _
  %p14 = scmp.eq.s32.totalorder 0, 0
  // Predicated region
  $region14: #{se_layer_down.1} parent=0 // pred_check
    %p15 = pneg %p14
  $region15: #{se_layer_down.1} parent=0 // pred_check_branch
    %17 = sbr.rel (%p15) target = $region17
  $region16: #{se_layer_down.1} parent=0 // pred_region
    %18 = vst [vmem:[#allocation2] sm:$0xf] 0.0
  $region17: #{se_layer_down.1} parent=0 // pred_fallthru
    _
  %v19 = vld [vmem:[#allocation2] sm:$0xf]
  %v20 = vld [vmem:[%s1] sm:$0xff]
  %v21 = vld [vmem:[%s1 + $0x8] sm:$0xff]
  %v24 = vcombine.high %v20, %v20
  %v25 = vcombine.high %v21, %v21
  %vm28 = vcmask 1043456
  %v29 = vsel %vm28, %v20, 0.0
  %v30 = vrot.slane %v29, 4
  %v31 = vadd.f32 %v29, %v30
  %v32 = vrot.slane %v31, 2
  %v33 = vadd.f32 %v31, %v32
  %v34 = vrot.slane %v33, 1
  %v35 = vadd.f32 %v33, %v34
  %v36 = vsel %vm28, %v24, 0.0
  %v37 = vrot.slane %v36, 4
  %v38 = vadd.f32 %v36, %v37
  %v39 = vrot.slane %v38, 2
  %v40 = vadd.f32 %v38, %v39
  %v41 = vrot.slane %v40, 1
  %v42 = vadd.f32 %v40, %v41
  %v43 = vsel %vm28, %v21, 0.0
  %v44 = vrot.slane %v43, 4
  %v45 = vadd.f32 %v43, %v44
  %v46 = vrot.slane %v45, 2
  %v47 = vadd.f32 %v45, %v46
  %v48 = vrot.slane %v47, 1
  %v49 = vadd.f32 %v47, %v48
  %v50 = vsel %vm28, %v25, 0.0
  %v51 = vrot.slane %v50, 4
  %v52 = vadd.f32 %v50, %v51
  %v53 = vrot.slane %v52, 2
  %v54 = vadd.f32 %v52, %v53
  %v55 = vrot.slane %v54, 1
  %v56 = vadd.f32 %v54, %v55
  %v61 = vcombine.low %v35, %v42
  %v63 = vunpack.c.l.s4 1983009808
  %v64 = vunpack.c.0.s8 %v63
  %v65 = vlaneseq
  %v66 = vshrl.u32 %v65, 7
  %v67 = vsub.s32 %v64, %v66
  %v68 = vrot.slane %v61, %v67
  %v69 = vcombine.low %v49, %v56
  %v71 = vunpack.c.l.s4 1983009808
  %v72 = vunpack.c.0.s8 %v71
  %v73 = vlaneseq
  %v74 = vshrl.u32 %v73, 7
  %v75 = vsub.s32 %v72, %v74
  %v76 = vrot.slane %v69, %v75
  %vm77 = vcmask 1044484
  %v78 = vsel %vm77, %v68, %v68
  %vm79 = vcmask 1046534
  %v80 = vsel %vm79, %v68, %v78
  %v81 = vrot.slane %v76, 7
  %vm82 = vcmask 1041409
  %v83 = vsel %vm82, %v81, %v80
  %vm84 = vcmask 1043459
  %v85 = vsel %vm84, %v81, %v83
  %vm86 = vcmask 1045509
  %v87 = vsel %vm86, %v81, %v85
  %vm88 = vcmask 1047559
  %v89 = vsel %vm88, %v81, %v87
  %v91 = vadd.f32 %v19, %v89
  %92 = vst [vmem:[#allocation2] sm:$0xf] %v91
  // Predicated region
  $region18: #{se_layer_down.1} parent=0 // pred_check
    %p93 = pneg %p14
  $region19: #{se_layer_down.1} parent=0 // pred_check_branch
    %95 = sbr.rel (%p93) target = $region21
  $region20: #{se_layer_down.1} parent=0 // pred_region
    %v96 = vld [vmem:[#allocation2] sm:$0xf]
    %v97 = vld [vmem:[%s0] sm:$0xff]
    %v98 = vld [vmem:[%s0 + $0x8] sm:$0xff]
    %v99 = vld [vmem:[%s0 + $0x10] sm:$0xff]
    %v100 = vld [vmem:[%s0 + $0x18] sm:$0xff]
    %v101 = vld [vmem:[%s0 + $0x20] sm:$0xff]
    %v102 = vld [vmem:[%s0 + $0x28] sm:$0xff]
    %v103 = vld [vmem:[%s0 + $0x30] sm:$0xff]
    %v104 = vld [vmem:[%s0 + $0x38] sm:$0xff]
    %v105 = vld [vmem:[%s0 + $0x40] sm:$0xff]
    %v106 = vld [vmem:[%s0 + $0x48] sm:$0xff]
    %v107 = vld [vmem:[%s0 + $0x50] sm:$0xff]
    %v108 = vld [vmem:[%s0 + $0x58] sm:$0xff]
    %v109 = vld [vmem:[%s0 + $0x60] sm:$0xff]
    %v110 = vld [vmem:[%s0 + $0x68] sm:$0xff]
    %v111 = vld [vmem:[%s0 + $0x70] sm:$0xff]
    %v112 = vld [vmem:[%s0 + $0x78] sm:$0xff]
    %v113 = vld [vmem:[%s0 + $0x80] sm:$0xff]
    %v114 = vld [vmem:[%s0 + $0x88] sm:$0xff]
    %v115 = vld [vmem:[%s0 + $0x90] sm:$0xff]
    %v116 = vld [vmem:[%s0 + $0x98] sm:$0xff]
    %v117 = vld [vmem:[%s0 + $0xa0] sm:$0xff]
    %v118 = vld [vmem:[%s0 + $0xa8] sm:$0xff]
    %v119 = vld [vmem:[%s0 + $0xb0] sm:$0xff]
    %v120 = vld [vmem:[%s0 + $0xb8] sm:$0xff]
    %v121 = vld [vmem:[%s0 + $0xc0] sm:$0xff]
    %v122 = vld [vmem:[%s0 + $0xc8] sm:$0xff]
    %v123 = vld [vmem:[%s0 + $0xd0] sm:$0xff]
    %v124 = vld [vmem:[%s0 + $0xd8] sm:$0xff]
    %v125 = vld [vmem:[%s0 + $0xe0] sm:$0xff]
    %v126 = vld [vmem:[%s0 + $0xe8] sm:$0xff]
    %v127 = vld [vmem:[%s0 + $0xf0] sm:$0xff]
    %v128 = vld [vmem:[%s0 + $0xf8] sm:$0xff]
    %v131 = vunpack.c.l.s4 1983009808
    %v132 = vunpack.c.0.s8 %v131
    %v133 = vlaneseq
    %v134 = vshrl.u32 %v133, 7
    %v135 = vsub.s32 %v132, %v134
    %v136 = vrot.slane %v96, %v135
    %v137 = vcombine.high %v136, %v136
    %140 = vmatprep.subr.mxu0 0.0
    %141 = vmatpush1.msra.mxu0 %v97
    %142 = vmatprep.subr.mxu0 0.0
    %143 = vmatpush1.msra.mxu0 %v98
    %144 = vmatprep.subr.mxu0 0.0
    %145 = vmatpush1.msra.mxu0 %v99
    %146 = vmatprep.subr.mxu0 0.0
    %147 = vmatpush1.msra.mxu0 %v100
    %148 = vmatprep.subr.mxu0 0.0
    %149 = vmatpush1.msra.mxu0 %v101
    %150 = vmatprep.subr.mxu0 0.0
    %151 = vmatpush1.msra.mxu0 %v102
    %152 = vmatprep.subr.mxu0 0.0
    %153 = vmatpush1.msra.mxu0 %v103
    %154 = vmatprep.subr.mxu0 0.0
    %155 = vmatpush1.msra.mxu0 %v104
    %156 = vmatprep.subr.mxu0 0.0
    %157 = vmatpush1.msra.mxu0 %v105
    %158 = vmatprep.subr.mxu0 0.0
    %159 = vmatpush1.msra.mxu0 %v106
    %160 = vmatprep.subr.mxu0 0.0
    %161 = vmatpush1.msra.mxu0 %v107
    %162 = vmatprep.subr.mxu0 0.0
    %163 = vmatpush1.msra.mxu0 %v108
    %164 = vmatprep.subr.mxu0 0.0
    %165 = vmatpush1.msra.mxu0 %v109
    %166 = vmatprep.subr.mxu0 0.0
    %167 = vmatpush1.msra.mxu0 %v110
    %168 = vmatprep.subr.mxu0 0.0
    %169 = vmatpush1.msra.mxu0 %v111
    %170 = vmatprep.subr.mxu0 0.0
    %171 = vmatpush1.msra.mxu0 %v112
    %172 = vmatprep.subr.mxu0 0.0
    %173 = vmatpush1.msra.mxu0 %v113
    %174 = vmatprep.subr.mxu0 0.0
    %175 = vmatpush1.msra.mxu0 %v114
    %176 = vmatprep.subr.mxu0 0.0
    %177 = vmatpush1.msra.mxu0 %v115
    %178 = vmatprep.subr.mxu0 0.0
    %179 = vmatpush1.msra.mxu0 %v116
    %180 = vmatprep.subr.mxu0 0.0
    %181 = vmatpush1.msra.mxu0 %v117
    %182 = vmatprep.subr.mxu0 0.0
    %183 = vmatpush1.msra.mxu0 %v118
    %184 = vmatprep.subr.mxu0 0.0
    %185 = vmatpush1.msra.mxu0 %v119
    %186 = vmatprep.subr.mxu0 0.0
    %187 = vmatpush1.msra.mxu0 %v120
    %188 = vmatprep.subr.mxu0 0.0
    %189 = vmatpush1.msra.mxu0 %v121
    %190 = vmatprep.subr.mxu0 0.0
    %191 = vmatpush1.msra.mxu0 %v122
    %192 = vmatprep.subr.mxu0 0.0
    %193 = vmatpush1.msra.mxu0 %v123
    %194 = vmatprep.subr.mxu0 0.0
    %195 = vmatpush1.msra.mxu0 %v124
    %196 = vmatprep.subr.mxu0 0.0
    %197 = vmatpush1.msra.mxu0 %v125
    %198 = vmatprep.subr.mxu0 0.0
    %199 = vmatpush1.msra.mxu0 %v126
    %200 = vmatprep.subr.mxu0 0.0
    %201 = vmatpush1.msra.mxu0 %v127
    %202 = vmatprep.subr.mxu0 0.0
    %203 = vmatpush1.msra.mxu0 %v128
    %204 = vmatprep.mubr.f32.mxu0 %v137
    %205 = vmatmul.mubr.f32.gmra.mrb[0].mxu0 %v136
    %v206 = vpop.f32.mrb[0].mxu0
    %v207 = vadd.f32 0.0, %v206
    %v208 = vpop.f32.mrb[0].mxu0
    %209 = vdwg.mxu0
    %211 = vrot.lane.b32.xlu0 %v207, 64
    %v212 = vpop.permute.xlu0 %211
    %vm214 = vcmask 523264
    %v215 = vsel %vm214, %v207, %v212
    %v216 = vld [vmem:[%s2] sm:$0xf]
    %v218 = vcombine.low %v215, %v215
    %v220 = vunpack.c.l.s4 1983009808
    %v221 = vunpack.c.0.s8 %v220
    %v222 = vlaneseq
    %v223 = vshrl.u32 %v222, 7
    %v224 = vsub.s32 %v221, %v223
    %v225 = vrot.slane %v218, %v224
    %v227 = vmul.f32 %v216, %v225
    %228 = vst [vmem:[%s3] sm:$0xf] %v227
  $region21: #{se_layer_down.1} parent=0 // pred_fallthru
    _
  // Predicated region
  $region22: #{se_layer_down.1} parent=0 // pred_check
    _
  $region23: #{se_layer_down.1} parent=0 // pred_check_branch
    %230 = sbr.rel (0) target = $region25
  $region24: #{se_layer_down.1} parent=0 // pred_region
    _
  $region25: #{se_layer_down.1} parent=0 // pred_fallthru
    _
  // Predicated region
  $region26: #{se_layer_down.1} parent=0 // pred_check
    _
  $region27: #{se_layer_down.1} parent=0 // pred_check_branch
    %232 = sbr.rel (0) target = $region29
  $region28: #{se_layer_down.1} parent=0 // pred_region
    _
  $region29: #{se_layer_down.1} parent=0 // pred_fallthru
    _

</llo_original>
